<compile_context>
chip_gen: v7x
topology: tpu7x:2x2x1
jax: 0.10.0
libtpu: 0.0.40
codegen_flags: <defaults>
</compile_context>

<pallas_src>
import jax
import jax.numpy as jnp
from jax import lax
from jax.experimental import pallas as pl
from jax.experimental.pallas import tpu as pltpu


def _nll_sum_kernel(x_ref, y_ref, m_ref, out_ref, acc_ref):
    i = pl.program_id(1)

    @pl.when(i == 0)
    def _():
        acc_ref[...] = jnp.zeros_like(acc_ref)

    x = x_ref[...].astype(jnp.float32)      # (TR, C) log-probs
    y = y_ref[...]                          # (TR, 1) int32 labels
    m = m_ref[...]                          # (TR, 1) f32; 0 on masked-out / padded rows

    class_ids = lax.broadcasted_iota(jnp.int32, x.shape, 1)      # (TR, C)
    sel = (class_ids == y) & (m > 0.0)                           # (TR, C) bool
    # Pure select-accumulate: no cross-lane reduce, no scalar RMW in the hot loop,
    # and -inf / NaN in non-selected entries never contaminate the sum.
    acc_ref[...] += jnp.where(sel, -x, 0.0)

    @pl.when(i == pl.num_programs(1) - 1)
    def _():
        total = jnp.sum(acc_ref[...])                            # epilogue-only reduce
        out_ref[...] = jnp.broadcast_to(total, out_ref.shape)


def _round_up(a, b):
    return -(-a // b) * b


def my_loss_nll(x, y, mask, *, num_par=2, max_row_tile=2048,
                vmem_budget_bytes=12 * 1024 * 1024):
    """Pallas equivalent of My_loss(type='nll_loss')(x, y, mask).

    x:    (N, C) float32/bfloat16 log-probabilities
    y:    (N,)   integer class indices
    mask: (N,)   bool/{0,1} row mask
    Returns a scalar float32 loss.
    """
    x = jnp.asarray(x)
    N, C = x.shape
    itemsize = jnp.dtype(x.dtype).itemsize

    # Row tile: the biggest multiple of 32 (works for f32 and bf16 sublane tiling)
    # that keeps double-buffered x + the f32 accumulator + y/m within budget.
    per_row = 2 * C * itemsize + 4 * C + 16
    row_tile = max(32, min(max_row_tile,
                           (vmem_budget_bytes // per_row) // 32 * 32))
    # Don't over-pad tiny inputs.
    row_tile = min(row_tile, _round_up(pl.cdiv(N, num_par), 32))
    row_tile = max(row_tile, 32)

    chunk = num_par * row_tile
    n_pad = _round_up(N, chunk)
    blocks_per_par = n_pad // chunk

    y2 = jnp.asarray(y).astype(jnp.int32).reshape(N, 1)
    m2 = jnp.asarray(mask).astype(jnp.float32).reshape(N, 1)
    cnt = jnp.sum(m2)                      # masked-row count computed by XLA (tiny traffic)

    if n_pad != N:
        pad = n_pad - N
        x = jnp.pad(x, ((0, pad), (0, 0)))
        y2 = jnp.pad(y2, ((0, pad), (0, 0)))
        m2 = jnp.pad(m2, ((0, pad), (0, 0)))   # padded rows have mask 0 -> contribute nothing

    def row_map(p, i):
        return (p * blocks_per_par + i, 0)

    partials = pl.pallas_call(
        _nll_sum_kernel,
        out_shape=jax.ShapeDtypeStruct((num_par, 8, 128), jnp.float32),
        grid_spec=pltpu.PrefetchScalarGridSpec(
            num_scalar_prefetch=0,
            grid=(num_par, blocks_per_par),
            in_specs=[
                pl.BlockSpec((row_tile, C), row_map),
                pl.BlockSpec((row_tile, 1), row_map),
                pl.BlockSpec((row_tile, 1), row_map),
            ],
            out_specs=pl.BlockSpec((1, 8, 128), lambda p, i: (p, 0, 0)),
            scratch_shapes=[pltpu.VMEM((row_tile, C), jnp.float32)],
        ),
        compiler_params=pltpu.CompilerParams(
            dimension_semantics=("parallel", "arbitrary"),
            vmem_limit_bytes=32 * 1024 * 1024,
        ),
    )(x, y2, m2)

    s = jnp.sum(partials[:, 0, 0])         # one value per (parallel) core
    loss = s / cnt                         # NaN when cnt == 0, exactly like torch
    return jnp.where(jnp.isnan(loss), jnp.float32(0.0), loss)


def _reference_loss(x, y, mask):
    # Pure-JAX reference of F.nll_loss(x[mask], y[mask]) with NaN->0.
    m = mask.astype(jnp.float32)
    picked = jnp.take_along_axis(
        x, y.reshape(-1, 1).astype(jnp.int32), axis=1)[:, 0].astype(jnp.float32)
    s = jnp.sum(jnp.where(m > 0, -picked, 0.0))
    c = jnp.sum(m)
    loss = s / c
    return jnp.where(jnp.isnan(loss), jnp.float32(0.0), loss)


if __name__ == "__main__":
    key = jax.random.PRNGKey(0)
    k1, k2, k3, k4, k5, k6 = jax.random.split(key, 6)

    # Small shapes consistent with the module: (N, C) log-probs, labels, row mask.
    N, C = 16, 8
    x = jax.nn.log_softmax(jax.random.normal(k1, (N, C), jnp.float32), axis=-1)
    y = jax.random.randint(k2, (N,), 0, C, dtype=jnp.int32)
    mask = jax.random.bernoulli(k3, 0.6, (N,))

    loss = my_loss_nll(x, y, mask)
    jax.block_until_ready(loss)
    ref = _reference_loss(x, y, mask)
    assert jnp.allclose(loss, ref, atol=1e-5, rtol=1e-5), (loss, ref)

    # Empty mask -> torch loss is NaN -> module returns 0.
    empty = my_loss_nll(x, y, jnp.zeros((N,), dtype=bool))
    jax.block_until_ready(empty)
    assert float(empty) == 0.0, empty

    # Ragged N / non-128 C (exercises row padding + the 2-way core split).
    N2, C2 = 200, 33
    x2 = jax.nn.log_softmax(jax.random.normal(k4, (N2, C2), jnp.float32), axis=-1)
    y2 = jax.random.randint(k5, (N2,), 0, C2, dtype=jnp.int32)
    m2 = jax.random.bernoulli(k6, 0.5, (N2,))
    l2 = my_loss_nll(x2, y2, m2)
    jax.block_until_ready(l2)
    r2 = _reference_loss(x2, y2, m2)
    assert jnp.allclose(l2, r2, atol=1e-5, rtol=1e-5), (l2, r2)

    # bf16 input path: x stays bf16 in HBM (half the traffic), f32 accumulate in-kernel.
    xb = x2.astype(jnp.bfloat16)
    lb = my_loss_nll(xb, y2, m2)
    jax.block_until_ready(lb)
    rb = _reference_loss(xb.astype(jnp.float32), y2, m2)
    assert jnp.allclose(lb, rb, atol=1e-3, rtol=1e-3), (lb, rb)

    print("KERNEL_OK")
</pallas_src>

<mosaic_0001>
module attributes {stable_mosaic.version = 11 : i64} {
  func.func @_nll_sum_kernel(%arg0: i32, %arg1: i32, %arg2: memref<32x8xf32, #tpu.memory_space<vmem>>, %arg3: memref<32x1xi32, #tpu.memory_space<vmem>>, %arg4: memref<32x1xf32, #tpu.memory_space<vmem>>, %arg5: memref<1x8x128xf32, #tpu.memory_space<vmem>>, %arg6: memref<32x8xf32, #tpu.memory_space<vmem>>) attributes {dimension_semantics = [#tpu.dimension_semantics<parallel>, #tpu.dimension_semantics<arbitrary>], iteration_bounds = array<i64: 2, 1>, scalar_prefetch = 0 : i64, scratch_operands = 1 : i64, tpu.core_type = #tpu.core_type<tc>, window_params = [{transform_indices = @transform_0, window_bounds = array<i64: 32, 8>}, {transform_indices = @transform_1, window_bounds = array<i64: 32, 1>}, {transform_indices = @transform_2, window_bounds = array<i64: 32, 1>}, {transform_indices = @transform_3, window_bounds = array<i64: 1, 8, 128>}]} {
    %c0_i32 = arith.constant 0 : i32
    %0 = arith.cmpi eq, %arg1, %c0_i32 : i32
    %1 = arith.extui %0 : i1 to i32
    %c0_i32_0 = arith.constant 0 : i32
    %2 = arith.cmpi ne, %1, %c0_i32_0 : i32
    scf.if %2 {
      %cst_14 = arith.constant 0.000000e+00 : f32
      %23 = vector.broadcast %cst_14 : f32 to vector<32x8xf32>
      %c0_15 = arith.constant 0 : index
      %c0_16 = arith.constant 0 : index
      %24 = vector.load %arg6[%c0_15, %c0_16] : memref<32x8xf32, #tpu.memory_space<vmem>>, vector<32x8xf32>
      tpu.vector_store %arg6[%c0_15, %c0_16], %23 {strides = array<i32>} : memref<32x8xf32, #tpu.memory_space<vmem>>, vector<32x8xf32>,
    } else {
    }
    %c0 = arith.constant 0 : index
    %c0_1 = arith.constant 0 : index
    %3 = vector.load %arg2[%c0, %c0_1] : memref<32x8xf32, #tpu.memory_space<vmem>>, vector<32x8xf32>
    %c0_2 = arith.constant 0 : index
    %c0_3 = arith.constant 0 : index
    %4 = vector.load %arg3[%c0_2, %c0_3] : memref<32x1xi32, #tpu.memory_space<vmem>>, vector<32x1xi32>
    %c0_4 = arith.constant 0 : index
    %c0_5 = arith.constant 0 : index
    %5 = vector.load %arg4[%c0_4, %c0_5] : memref<32x1xf32, #tpu.memory_space<vmem>>, vector<32x1xf32>
    %6 = tpu.iota {dimensions = array<i32: 1>} : vector<32x8xi32>
    %7 = vector.broadcast %4 : vector<32x1xi32> to vector<32x8xi32>
    %8 = arith.cmpi eq, %6, %7 : vector<32x8xi32>
    %cst = arith.constant 0.000000e+00 : f32
    %9 = vector.broadcast %cst : f32 to vector<32x1xf32>
    %10 = arith.cmpf ogt, %5, %9 : vector<32x1xf32>
    %11 = vector.broadcast %10 : vector<32x1xi1> to vector<32x8xi1>
    %12 = arith.andi %8, %11 : vector<32x8xi1>
    %c0_6 = arith.constant 0 : index
    %c0_7 = arith.constant 0 : index
    %13 = vector.load %arg6[%c0_6, %c0_7] : memref<32x8xf32, #tpu.memory_space<vmem>>, vector<32x8xf32>
    %cst_8 = arith.constant 0.000000e+00 : f32
    %14 = vector.broadcast %cst_8 : f32 to vector<32x8xf32>
    %15 = arith.subf %14, %3 : vector<32x8xf32>
    %cst_9 = arith.constant 0.000000e+00 : f32
    %16 = vector.broadcast %cst_9 : f32 to vector<32x8xf32>
    %17 = arith.select %12, %15, %16 : vector<32x8xi1>, vector<32x8xf32>
    %18 = arith.addf %13, %17 : vector<32x8xf32>
    %c0_10 = arith.constant 0 : index
    %c0_11 = arith.constant 0 : index
    %19 = vector.load %arg6[%c0_10, %c0_11] : memref<32x8xf32, #tpu.memory_space<vmem>>, vector<32x8xf32>
    tpu.vector_store %arg6[%c0_10, %c0_11], %18 {strides = array<i32>} : memref<32x8xf32, #tpu.memory_space<vmem>>, vector<32x8xf32>,
    %c0_i32_12 = arith.constant 0 : i32
    %20 = arith.cmpi eq, %arg1, %c0_i32_12 : i32
    %21 = arith.extui %20 : i1 to i32
    %c0_i32_13 = arith.constant 0 : i32
    %22 = arith.cmpi ne, %21, %c0_i32_13 : i32
    scf.if %22 {
      %c0_14 = arith.constant 0 : index
      %c0_15 = arith.constant 0 : index
      %23 = vector.load %arg6[%c0_14, %c0_15] : memref<32x8xf32, #tpu.memory_space<vmem>>, vector<32x8xf32>
      %24 = vector.shape_cast %23 : vector<32x8xf32> to vector<1x32x8xf32>
      %cst_16 = arith.constant dense<0.000000e+00> : vector<1xf32>
      %25 = vector.multi_reduction <add>, %24, %cst_16 [1, 2] : vector<1x32x8xf32> to vector<1xf32>
      %26 = vector.shape_cast %25 : vector<1xf32> to vector<1x1x1xf32>
      %27 = vector.extract %26[0, 0, 0] : f32 from vector<1x1x1xf32>
      %28 = vector.broadcast %27 : f32 to vector<1x8x128xf32>
      %c0_17 = arith.constant 0 : index
      %c0_18 = arith.constant 0 : index
      %c0_19 = arith.constant 0 : index
      %29 = vector.load %arg5[%c0_17, %c0_18, %c0_19] : memref<1x8x128xf32, #tpu.memory_space<vmem>>, vector<1x8x128xf32>
      tpu.vector_store %arg5[%c0_17, %c0_18, %c0_19], %28 {strides = array<i32>} : memref<1x8x128xf32, #tpu.memory_space<vmem>>, vector<1x8x128xf32>,
    } else {
    }
    return
  }
  func.func @transform_0(%arg0: i32, %arg1: i32) -> (i32, i32) {
    %c1_i32 = arith.constant 1 : i32
    %0 = arith.muli %arg0, %c1_i32 : i32
    %1 = arith.addi %0, %arg1 : i32
    %c0_i32 = arith.constant 0 : i32
    %c0_i32_0 = arith.constant 0 : i32
    return %1, %c0_i32 : i32, i32
  }
  func.func @transform_1(%arg0: i32, %arg1: i32) -> (i32, i32) {
    %c1_i32 = arith.constant 1 : i32
    %0 = arith.muli %arg0, %c1_i32 : i32
    %1 = arith.addi %0, %arg1 : i32
    %c0_i32 = arith.constant 0 : i32
    %c0_i32_0 = arith.constant 0 : i32
    return %1, %c0_i32 : i32, i32
  }
  func.func @transform_2(%arg0: i32, %arg1: i32) -> (i32, i32) {
    %c1_i32 = arith.constant 1 : i32
    %0 = arith.muli %arg0, %c1_i32 : i32
    %1 = arith.addi %0, %arg1 : i32
    %c0_i32 = arith.constant 0 : i32
    %c0_i32_0 = arith.constant 0 : i32
    return %1, %c0_i32 : i32, i32
  }
  func.func @transform_3(%arg0: i32, %arg1: i32) -> (i32, i32, i32) {
    %c0_i32 = arith.constant 0 : i32
    %c0_i32_0 = arith.constant 0 : i32
    %c0_i32_1 = arith.constant 0 : i32
    return %arg0, %c0_i32, %c0_i32_0 : i32, i32, i32
  }
}

</mosaic_0001>

<llo_original>
// kernel: tpu_custom_call.1
$region0: #{tpu_custom_call.1}
  #allocation0 [shape = 'u32[]', space=smem, size = 0x4, offset = 0x4, fixed_abs, tag = 'smem constant byte address 0x4 - core index']
  #allocation1 [shape = 'u32[144,128]{1,0:T(1,128)}', space=vmem, size = 0x12000, scoped, tag = 'internal scratch']
  #allocation2 [shape = 'f32[32,8]{1,0:T(8,128)}', space=vmem, size = 0x4000, scoped, tag = 'scratch operand']
  %s0 = inlined_call_operand.vmem [shape: f32[64,8], index: 0, kind: input, shape index: {}]
  %s1 = inlined_call_operand.vmem [shape: s32[64,1], index: 1, kind: input, shape index: {}]
  %s2 = inlined_call_operand.vmem [shape: f32[64,1], index: 2, kind: input, shape index: {}]
  %s3 = inlined_call_operand.hbm [shape: f32[2,8,128], index: 3, kind: output, shape index: {}]
  %s4 = sld [smem:[#allocation0]]
  $region53: #{tpu_custom_call.1} parent=0
    _
  %s6 = ssub.s32 1, %s4
  %s7 = scalar_select 0, %s6, %s4
  $region1: #{tpu_custom_call.1} parent=0
    #allocation3 [shape = 'u8[8192]{0}', space=vmem, size = 0x2000, scoped, tag = 'output window, operand 0']
    #allocation4 [shape = 's32[2]{0}', space=sflag, size = 0x8, scoped, tag = 'scoped memory for tpu_custom_call.1']
    %8 = vsyncpa [#allocation4], 0
    %s9 = scalar_lea.sflag [#allocation4], 1
    %10 = vsyncpa %s9, 0
    loop: start=0, step=1, limit=4
    $region2: #{tpu_custom_call.1} parent=1 // loop_pre_header
      _
    $region3: #{tpu_custom_call.1} parent=1 // loop_header
      %s12 = sphi 0, %s16
      %p13 = scmp.ge.s32.totalorder %s12, 4
      %s19 = sphi 0, %s31
      %s20 = sphi 0, %s27
      %s21 = sphi 0, %s19
      %s22 = sphi 0, %s20
      %s23 = sphi 0, %s21
      %s24 = sphi 0, %s22
      %s36 = sphi 0, %s38
      %s39 = sphi 0, %s36
      %s40 = sphi 0, %s39
      %s56 = sphi 0, %s40
      %s64 = sphi 0, %s66
      %s67 = sphi 0, %s64
      %s68 = sphi 0, %s67
      %s84 = sphi 0, %s68
      %s92 = sphi 0, %s94
      %s95 = sphi 0, %s92
      %s96 = sphi 0, %s95
      %s112 = sphi 0, %s96
      %s118 = sphi 0, %s120
      %s121 = sphi 0, %s118
      %s122 = sphi 0, %s121
      %s138 = sphi 0, %s122
    $region4: #{tpu_custom_call.1} parent=1 // loop_header_branch
      %15 = sbr.rel (%p13) target = $region8
    $region5: #{tpu_custom_call.1} parent=1 // loop_body
      %s17 = ssub.s32 %s12, 1
      %s18 = ssub.s32 %s12, 2
      %s25 = sadd.s32 1, %s20
      %p26 = scmp.ge.s32.totalorder %s25, 1
      %s27 = scalar_select %p26, 0, %s25
      %s28 = sadd.s32 1, %s19
      %s29 = scalar_select %p26, %s28, %s19
      %p30 = scmp.ge.s32.totalorder %s29, 2
      %s31 = scalar_select %p30, 0, %s29
      %s32 = sadd.s32 %s19, %s20
      %s33 = sadd.s32 %s31, %s27
      %s34 = ssub.s32 %s32, %s33
      %p35 = scmp.eq.s32.totalorder %s34, 0
      %s37 = sadd.s32 %s36, 1
      %s38 = scalar_select %p35, %s36, %s37
      %p41 = pneg %p35
      %p42 = scmp.eq.s32.totalorder %s12, 1
      %p43 = por %p41, %p42
      %p44 = scmp.ne.s32.totalorder %s36, %s39
      %p45 = scmp.eq.s32.totalorder %s12, 0
      %p46 = por %p44, %p45
      %p47 = scmp.ne.s32.totalorder %s36, %s39
      %p48 = scmp.eq.s32.totalorder %s17, 1
      %p49 = por %p47, %p48
      %p50 = scmp.ne.s32.totalorder %s39, %s40
      %p51 = scmp.eq.s32.totalorder %s17, 0
      %p52 = por %p50, %p51
      %p53 = scmp.ne.s32.totalorder %s39, %s40
      %p54 = scmp.eq.s32.totalorder %s18, 1
      %p55 = por %p53, %p54
      %p57 = scmp.ne.s32.totalorder %s40, %s56
      %p58 = scmp.eq.s32.totalorder %s18, 0
      %p59 = por %p57, %p58
      %s60 = sadd.s32 %s19, %s20
      %s61 = sadd.s32 %s31, %s27
      %s62 = ssub.s32 %s60, %s61
      %p63 = scmp.eq.s32.totalorder %s62, 0
      %s65 = sadd.s32 %s64, 1
      %s66 = scalar_select %p63, %s64, %s65
      %p69 = pneg %p63
      %p70 = scmp.eq.s32.totalorder %s12, 1
      %p71 = por %p69, %p70
      %p72 = scmp.ne.s32.totalorder %s64, %s67
      %p73 = scmp.eq.s32.totalorder %s12, 0
      %p74 = por %p72, %p73
      %p75 = scmp.ne.s32.totalorder %s64, %s67
      %p76 = scmp.eq.s32.totalorder %s17, 1
      %p77 = por %p75, %p76
      %p78 = scmp.ne.s32.totalorder %s67, %s68
      %p79 = scmp.eq.s32.totalorder %s17, 0
      %p80 = por %p78, %p79
      %p81 = scmp.ne.s32.totalorder %s67, %s68
      %p82 = scmp.eq.s32.totalorder %s18, 1
      %p83 = por %p81, %p82
      %p85 = scmp.ne.s32.totalorder %s68, %s84
      %p86 = scmp.eq.s32.totalorder %s18, 0
      %p87 = por %p85, %p86
      %s88 = sadd.s32 %s19, %s20
      %s89 = sadd.s32 %s31, %s27
      %s90 = ssub.s32 %s88, %s89
      %p91 = scmp.eq.s32.totalorder %s90, 0
      %s93 = sadd.s32 %s92, 1
      %s94 = scalar_select %p91, %s92, %s93
      %p97 = pneg %p91
      %p98 = scmp.eq.s32.totalorder %s12, 1
      %p99 = por %p97, %p98
      %p100 = scmp.ne.s32.totalorder %s92, %s95
      %p101 = scmp.eq.s32.totalorder %s12, 0
      %p102 = por %p100, %p101
      %p103 = scmp.ne.s32.totalorder %s92, %s95
      %p104 = scmp.eq.s32.totalorder %s17, 1
      %p105 = por %p103, %p104
      %p106 = scmp.ne.s32.totalorder %s95, %s96
      %p107 = scmp.eq.s32.totalorder %s17, 0
      %p108 = por %p106, %p107
      %p109 = scmp.ne.s32.totalorder %s95, %s96
      %p110 = scmp.eq.s32.totalorder %s18, 1
      %p111 = por %p109, %p110
      %p113 = scmp.ne.s32.totalorder %s96, %s112
      %p114 = scmp.eq.s32.totalorder %s18, 0
      %p115 = por %p113, %p114
      %s116 = ssub.s32 %s19, %s31
      %p117 = scmp.eq.s32.totalorder %s116, 0
      %s119 = sadd.s32 %s118, 1
      %s120 = scalar_select %p117, %s118, %s119
      %p123 = pneg %p117
      %p124 = scmp.eq.s32.totalorder %s12, 1
      %p125 = por %p123, %p124
      %p126 = scmp.ne.s32.totalorder %s118, %s121
      %p127 = scmp.eq.s32.totalorder %s12, 0
      %p128 = por %p126, %p127
      %p129 = scmp.ne.s32.totalorder %s118, %s121
      %p130 = scmp.eq.s32.totalorder %s17, 1
      %p131 = por %p129, %p130
      %p132 = scmp.ne.s32.totalorder %s121, %s122
      %p133 = scmp.eq.s32.totalorder %s17, 0
      %p134 = por %p132, %p133
      %p135 = scmp.ne.s32.totalorder %s121, %s122
      %p136 = scmp.eq.s32.totalorder %s18, 1
      %p137 = por %p135, %p136
      %p139 = scmp.ne.s32.totalorder %s122, %s138
      %p140 = scmp.eq.s32.totalorder %s18, 0
      %p141 = por %p139, %p140
      %p142 = scmp.le.s32.totalorder 1, %s12
      %p143 = scmp.lt.s32.totalorder %s12, 3
      %p144 = pnand %p142, %p143
      %p145 = pneg %p144
      // Predicated region
      $region9: #{tpu_custom_call.1} parent=5 // pred_check
        _
      $region10: #{tpu_custom_call.1} parent=5 // pred_check_branch
        %147 = sbr.rel (%p144) target = $region12
      $region11: #{tpu_custom_call.1} parent=5 // pred_region
        %s148 = ssub.s32 %s12, 1
      $region12: #{tpu_custom_call.1} parent=5 // pred_fallthru
        _
      %p149 = scmp.lt.s32.totalorder %s12, 2
      // Predicated region
      $region13: #{tpu_custom_call.1} parent=5 // pred_check
        %p150 = pneg %p149
      $region14: #{tpu_custom_call.1} parent=5 // pred_check_branch
        %152 = sbr.rel (%p150) target = $region16
      $region15: #{tpu_custom_call.1} parent=5 // pred_region
        // Predicated region
        $region17: #{tpu_custom_call.1} parent=15 // pred_check
          %p153 = pneg %p46
        $region18: #{tpu_custom_call.1} parent=15 // pred_check_branch
          %155 = sbr.rel (%p153) target = $region20
        $region19: #{tpu_custom_call.1} parent=15 // pred_region
          %s156 = sadd.s32 %s19, %s20
          %s157 = smul.u32 4, %s156
          %p158 = scmp.lt.s32.totalorder %s157, 7
          %s159 = scalar_select %p158, %s157, 7
          %s160 = smul.addr %s159, 8
          %s161 = scalar_lea.vmem %s0, %s160
          %s162 = sadd.s32 %s19, %s20
          %s163 = smul.u32 4, %s162
        $region20: #{tpu_custom_call.1} parent=15 // pred_fallthru
          _
        // Predicated region
        $region21: #{tpu_custom_call.1} parent=15 // pred_check
          %p164 = pneg %p74
        $region22: #{tpu_custom_call.1} parent=15 // pred_check_branch
          %166 = sbr.rel (%p164) target = $region24
        $region23: #{tpu_custom_call.1} parent=15 // pred_region
          %s167 = sadd.s32 %s19, %s20
          %s168 = smul.u32 4, %s167
          %p169 = scmp.lt.s32.totalorder %s168, 7
          %s170 = scalar_select %p169, %s168, 7
          %s171 = smul.addr %s170, 8
          %s172 = scalar_lea.vmem %s1, %s171
          %s173 = sadd.s32 %s19, %s20
          %s174 = smul.u32 4, %s173
        $region24: #{tpu_custom_call.1} parent=15 // pred_fallthru
          _
        // Predicated region
        $region25: #{tpu_custom_call.1} parent=15 // pred_check
          %p175 = pneg %p102
        $region26: #{tpu_custom_call.1} parent=15 // pred_check_branch
          %177 = sbr.rel (%p175) target = $region28
        $region27: #{tpu_custom_call.1} parent=15 // pred_region
          %s178 = sadd.s32 %s19, %s20
          %s179 = smul.u32 4, %s178
          %p180 = scmp.lt.s32.totalorder %s179, 7
          %s181 = scalar_select %p180, %s179, 7
          %s182 = smul.addr %s181, 8
          %s183 = scalar_lea.vmem %s2, %s182
          %s184 = sadd.s32 %s19, %s20
          %s185 = smul.u32 4, %s184
        $region28: #{tpu_custom_call.1} parent=15 // pred_fallthru
          _
      $region16: #{tpu_custom_call.1} parent=5 // pred_fallthru
        _
      %p186 = scmp.le.s32.totalorder 1, %s12
      %p187 = scmp.lt.s32.totalorder %s12, 3
      %p188 = pnand %p186, %p187
      %p189 = pneg %p188
      // Predicated region
      $region29: #{tpu_custom_call.1} parent=5 // pred_check
        _
      $region30: #{tpu_custom_call.1} parent=5 // pred_check_branch
        %191 = sbr.rel (%p188) target = $region32
      $region31: #{tpu_custom_call.1} parent=5 // pred_region
        %s192 = ssub.s32 %s12, 1
        %s193 = sadd.s32 %s21, %s22
        %s194 = smul.u32 4, %s193
        %p195 = scmp.lt.s32.totalorder %s194, 7
        %s196 = scalar_select %p195, %s194, 7
        %s197 = smul.addr %s196, 8
        %s198 = scalar_lea.vmem %s0, %s197
        %p199 = pneg %p52
        %p200 = pneg %p49
        %s201 = sadd.s32 %s21, %s22
        %s202 = smul.u32 4, %s201
        %p203 = scmp.lt.s32.totalorder %s202, 7
        %s204 = scalar_select %p203, %s202, 7
        %s205 = smul.addr %s204, 8
        %s206 = scalar_lea.vmem %s1, %s205
        %p207 = pneg %p80
        %p208 = pneg %p77
        %s209 = sadd.s32 %s21, %s22
        %s210 = smul.u32 4, %s209
        %p211 = scmp.lt.s32.totalorder %s210, 7
        %s212 = scalar_select %p211, %s210, 7
        %s213 = smul.addr %s212, 8
        %s214 = scalar_lea.vmem %s2, %s213
        %p215 = pneg %p108
        %p216 = pneg %p105
        %p217 = pneg %p134
        %p218 = pneg %p131
        %s219 = sand.u32 %s121, 1
        %s220 = scalar_lea.sflag [#allocation4], %s219
        %s221 = sand.u32 %s121, 1
        %s222 = smul.addr %s221, 8
        %s223 = scalar_lea.vmem [#allocation3], %s222
        %s224 = sadd.s32 %s21, %s22
        %s225 = smul.u32 4, %s224
        %p226 = scmp.lt.s32.totalorder %s225, 7
        %s227 = scalar_select %p226, %s225, 7
        %s228 = smul.addr %s227, 8
        %s229 = scalar_lea.vmem %s0, %s228
        %s230 = sadd.s32 %s21, %s22
        %s231 = smul.u32 4, %s230
        %s232 = sadd.s32 %s21, %s22
        %s233 = smul.u32 4, %s232
        %p234 = scmp.lt.s32.totalorder %s233, 7
        %s235 = scalar_select %p234, %s233, 7
        %s236 = smul.addr %s235, 8
        %s237 = scalar_lea.vmem %s1, %s236
        %s238 = sadd.s32 %s21, %s22
        %s239 = smul.u32 4, %s238
        %s240 = sadd.s32 %s21, %s22
        %s241 = smul.u32 4, %s240
        %p242 = scmp.lt.s32.totalorder %s241, 7
        %s243 = scalar_select %p242, %s241, 7
        %s244 = smul.addr %s243, 8
        %s245 = scalar_lea.vmem %s2, %s244
        %s246 = sadd.s32 %s21, %s22
        %s247 = smul.u32 4, %s246
        %p248 = scmp.eq.s32.totalorder %s22, 0
        // Predicated region
        $region33: #{tpu_custom_call.1} parent=31 // pred_check
          %p249 = pneg %p248
        $region34: #{tpu_custom_call.1} parent=31 // pred_check_branch
          %251 = sbr.rel (%p249) target = $region36
        $region35: #{tpu_custom_call.1} parent=31 // pred_region
          %vm252 = vcmask 64512
          %253 = vst.msk [vmem:[#allocation2] sm:$0xff] %vm252, 0.0
          %254 = vst.msk [vmem:[#allocation2 + $0x8] sm:$0xff] %vm252, 0.0
          %255 = vst.msk [vmem:[#allocation2 + $0x10] sm:$0xff] %vm252, 0.0
          %256 = vst.msk [vmem:[#allocation2 + $0x18] sm:$0xff] %vm252, 0.0
        $region36: #{tpu_custom_call.1} parent=31 // pred_fallthru
          _
        %v257 = vld [vmem:[%s229] sm:$0xff]
        %v258 = vld [vmem:[%s229 + $0x8] sm:$0xff]
        %v259 = vld [vmem:[%s229 + $0x10] sm:$0xff]
        %v260 = vld [vmem:[%s229 + $0x18] sm:$0xff]
        %v261 = vld [vmem:[%s237] sm:$0xff]
        %v262 = vld [vmem:[%s237 + $0x8] sm:$0xff]
        %v263 = vld [vmem:[%s237 + $0x10] sm:$0xff]
        %v264 = vld [vmem:[%s237 + $0x18] sm:$0xff]
        %v265 = vld [vmem:[%s245] sm:$0xff]
        %v266 = vld [vmem:[%s245 + $0x8] sm:$0xff]
        %v267 = vld [vmem:[%s245 + $0x10] sm:$0xff]
        %v268 = vld [vmem:[%s245 + $0x18] sm:$0xff]
        %v269 = vlaneseq
        %v270 = vand.u32 %v269, 127
        %271 = vset.pattern.permute.xlu0 0
        %272 = vperm.xlu0 %271, %v261
        %v273 = vpop.permute.xlu0 %272
        %274 = vset.pattern.permute.xlu0 0
        %275 = vperm.xlu0 %274, %v262
        %v276 = vpop.permute.xlu0 %275
        %277 = vset.pattern.permute.xlu0 0
        %278 = vperm.xlu0 %277, %v263
        %v279 = vpop.permute.xlu0 %278
        %280 = vset.pattern.permute.xlu0 0
        %281 = vperm.xlu0 %280, %v264
        %v282 = vpop.permute.xlu0 %281
        %vm283 = vcmp.eq.s32.totalorder %v270, %v273
        %vm284 = vcmp.eq.s32.totalorder %v270, %v276
        %vm285 = vcmp.eq.s32.totalorder %v270, %v279
        %vm286 = vcmp.eq.s32.totalorder %v270, %v282
        %vm287 = vcmp.gt.f32.partialorder %v265, 0.0
        %vm288 = vcmp.gt.f32.partialorder %v266, 0.0
        %vm289 = vcmp.gt.f32.partialorder %v267, 0.0
        %vm290 = vcmp.gt.f32.partialorder %v268, 0.0
        %v291 = vsel %vm287, 1, 0
        %v292 = vsel %vm288, 1, 0
        %v293 = vsel %vm289, 1, 0
        %v294 = vsel %vm290, 1, 0
        %295 = vset.pattern.permute.xlu0 0
        %296 = vperm.xlu0 %295, %v291
        %v297 = vpop.permute.xlu0 %296
        %298 = vset.pattern.permute.xlu0 0
        %299 = vperm.xlu0 %298, %v292
        %v300 = vpop.permute.xlu0 %299
        %301 = vset.pattern.permute.xlu0 0
        %302 = vperm.xlu0 %301, %v293
        %v303 = vpop.permute.xlu0 %302
        %304 = vset.pattern.permute.xlu0 0
        %305 = vperm.xlu0 %304, %v294
        %v306 = vpop.permute.xlu0 %305
        %vm307 = vcmp.eq.s32.totalorder %v297, 1
        %vm308 = vcmp.eq.s32.totalorder %v300, 1
        %vm309 = vcmp.eq.s32.totalorder %v303, 1
        %vm310 = vcmp.eq.s32.totalorder %v306, 1
        %vm311 = vmand %vm283, %vm307
        %vm312 = vmand %vm284, %vm308
        %vm313 = vmand %vm285, %vm309
        %vm314 = vmand %vm286, %vm310
        %v315 = vld [vmem:[#allocation2] sm:$0xff]
        %v316 = vld [vmem:[#allocation2 + $0x8] sm:$0xff]
        %v317 = vld [vmem:[#allocation2 + $0x10] sm:$0xff]
        %v318 = vld [vmem:[#allocation2 + $0x18] sm:$0xff]
        %v319 = vsub.f32 0.0, %v257
        %v320 = vsub.f32 0.0, %v258
        %v321 = vsub.f32 0.0, %v259
        %v322 = vsub.f32 0.0, %v260
        %v323 = vsel %vm311, %v319, 0.0
        %v324 = vsel %vm312, %v320, 0.0
        %v325 = vsel %vm313, %v321, 0.0
        %v326 = vsel %vm314, %v322, 0.0
        %v327 = vadd.f32 %v315, %v323
        %v328 = vadd.f32 %v316, %v324
        %v329 = vadd.f32 %v317, %v325
        %v330 = vadd.f32 %v318, %v326
        %vm331 = vcmask 64512
        %332 = vst.msk [vmem:[#allocation2] sm:$0xff] %vm331, %v327
        %333 = vst.msk [vmem:[#allocation2 + $0x8] sm:$0xff] %vm331, %v328
        %334 = vst.msk [vmem:[#allocation2 + $0x10] sm:$0xff] %vm331, %v329
        %335 = vst.msk [vmem:[#allocation2 + $0x18] sm:$0xff] %vm331, %v330
        // Predicated region
        $region37: #{tpu_custom_call.1} parent=31 // pred_check
          %p336 = pneg %p248
        $region38: #{tpu_custom_call.1} parent=31 // pred_check_branch
          %338 = sbr.rel (%p336) target = $region40
        $region39: #{tpu_custom_call.1} parent=31 // pred_region
          %v339 = vld [vmem:[#allocation2] sm:$0xff]
          %v340 = vld [vmem:[#allocation2 + $0x8] sm:$0xff]
          %v341 = vld [vmem:[#allocation2 + $0x10] sm:$0xff]
          %v342 = vld [vmem:[#allocation2 + $0x18] sm:$0xff]
          %v343 = vsel %vm331, %v339, 0.0
          %v344 = vsel %vm331, %v340, 0.0
          %v345 = vadd.f32 %v343, %v344
          %v346 = vsel %vm331, %v341, 0.0
          %v347 = vadd.f32 %v345, %v346
          %v348 = vsel %vm331, %v342, 0.0
          %v349 = vadd.f32 %v347, %v348
          %350 = vadd.xlane.f32.xlu0 %v349
          %v351 = vpop.xlane.xlu0 %350
          %v352 = vrot.slane %v351, 4
          %v353 = vadd.f32 %v351, %v352
          %v354 = vrot.slane %v353, 2
          %v355 = vadd.f32 %v353, %v354
          %v356 = vrot.slane %v355, 1
          %v357 = vadd.f32 %v355, %v356
          %s358 = vtos %v357
          %v359 = vstv %s358
          %360 = vst [vmem:[%s223] sm:$0xff] %v359
        $region40: #{tpu_custom_call.1} parent=31 // pred_fallthru
          _
        %s361 = sand.u32 %s121, 1
        %s362 = scalar_lea.sflag [#allocation4], %s361
        %s363 = sand.u32 %s121, 1
        %s364 = smul.addr %s363, 8
        %s365 = scalar_lea.vmem [#allocation3], %s364
        // Predicated region
        $region41: #{tpu_custom_call.1} parent=31 // pred_check
          %p366 = pneg %p131
        $region42: #{tpu_custom_call.1} parent=31 // pred_check_branch
          %368 = sbr.rel (%p366) target = $region44
        $region43: #{tpu_custom_call.1} parent=31 // pred_region
          %s370 = ssub.s32 128, 128
          %371 = vsyncadd %s362, %s370
          %s372 = smul.addr %s21, 128
          %s373 = scalar_lea.hbm %s3, %s372
          %s375 = sshll.u32 %s365, 4
          %s376 = int_to_ptr.vmem [resolvable:$true] %s375
          %378 = dma.vmem_to_hbm [thread:$0]  %s376, 128, %s373, %s362
        $region44: #{tpu_custom_call.1} parent=31 // pred_fallthru
          _
      $region32: #{tpu_custom_call.1} parent=5 // pred_fallthru
        _
      %p379 = scmp.le.s32.totalorder 2, %s12
      // Predicated region
      $region45: #{tpu_custom_call.1} parent=5 // pred_check
        %p380 = pneg %p379
      $region46: #{tpu_custom_call.1} parent=5 // pred_check_branch
        %382 = sbr.rel (%p380) target = $region48
      $region47: #{tpu_custom_call.1} parent=5 // pred_region
        %s383 = ssub.s32 %s12, 2
        // Predicated region
        $region49: #{tpu_custom_call.1} parent=47 // pred_check
          %p384 = pneg %p137
        $region50: #{tpu_custom_call.1} parent=47 // pred_check_branch
          %386 = sbr.rel (%p384) target = $region52
        $region51: #{tpu_custom_call.1} parent=47 // pred_region
          %s387 = sand.u32 %s122, 1
          %s388 = scalar_lea.sflag [#allocation4], %s387
          %s389 = sand.u32 %s122, 1
          %s390 = smul.addr %s389, 8
          %s391 = scalar_lea.vmem [#allocation3], %s390
          %392 = dma.done %s388, 128
        $region52: #{tpu_custom_call.1} parent=47 // pred_fallthru
          _
      $region48: #{tpu_custom_call.1} parent=5 // pred_fallthru
        _
    $region6: #{tpu_custom_call.1} parent=1 // loop_footer
      %s16 = sadd.s32 1, %s12
    $region7: #{tpu_custom_call.1} parent=1 // loop_footer_branch
      %11 = sbr.rel target = $region3
    $region8: #{tpu_custom_call.1} parent=1 // loop_exit
      _
    %393 = vsyncpa [#allocation4], 1
    %s394 = scalar_lea.sflag [#allocation4], 1
    %395 = vsyncpa %s394, 1

</llo_original>
